<compile_context>
chip_gen: v7x
topology: tpu7x:2x2x1
jax: 0.10.0
libtpu: 0.0.40
codegen_flags: <defaults>
</compile_context>

<pallas_src>
import jax
import jax.numpy as jnp
from jax import lax
from jax.experimental import pallas as pl
from jax.experimental.pallas import tpu as pltpu

_LANES = 128
_SUBLANES = 8
_PARTIAL_ROWS = 64  # reduction partial height -> 8 independent accumulator vregs


# ---------------- sizing helpers -------------------------------------------------

def _vmem_budget_bytes():
    """Total double-buffered block budget; conservative unless we know v6e/v7x."""
    budget = 12 << 20  # fits v5e's 16 MiB scoped-VMEM default with headroom
    try:
        kind = jax.devices()[0].device_kind.lower()
        if ("v6" in kind) or ("v7" in kind) or ("7x" in kind):
            budget = 24 << 20  # under the 32 MiB scoped default on v6e / v7x
    except Exception:
        pass
    return budget


def _choose_tile_rows(rows, bytes_per_row):
    """Rows per block so that (streams x 2 buffers x block) stays in budget."""
    max_rows = max(_SUBLANES, _vmem_budget_bytes() // (2 * bytes_per_row))
    if rows <= max_rows:
        return rows  # single block covering the whole array (block == full dims)
    return max(_PARTIAL_ROWS, (max_rows // _PARTIAL_ROWS) * _PARTIAL_ROWS)


def _partial_rows(tile_rows):
    for p in (64, 32, 16, 8):
        if tile_rows % p == 0:
            return p
    return tile_rows


# ---------------- kernels ---------------------------------------------------------

def _make_sum_kernel(stream_t, stream_w, tile_rows, p_rows, need_mask, n_valid):
    """Per-block partial sum of (x-t)^2*w reduced to a (p_rows, 128) f32 tile."""

    def kernel(x_ref, t_ref, w_ref, out_ref):
        x = x_ref[...].astype(jnp.float32)
        t = (t_ref[...] if stream_t else t_ref[0]).astype(jnp.float32)
        w = (w_ref[...] if stream_w else w_ref[0]).astype(jnp.float32)
        d = x - t
        dw = d * d * w
        if need_mask:
            # Mask both padded tail elements and garbage rows of a partial last block.
            i = pl.program_id(0)
            row = lax.broadcasted_iota(jnp.int32, dw.shape, 0)
            lane = lax.broadcasted_iota(jnp.int32, dw.shape, 1)
            gidx = (i * tile_rows + row) * _LANES + lane
            dw = jnp.where(gidx < n_valid, dw, 0.0)
        # (tile_rows/p_rows) dependent adds per accumulator, p_rows/8 independent
        # accumulator vregs -> VPU chain stays hidden under DMA even on v7x.
        out_ref[...] = jnp.sum(dw.reshape(-1, p_rows, _LANES), axis=0)

    return kernel


def _make_elem_kernel(stream_t, stream_w):
    """Elementwise (x-t)^2*w computed in f32, stored in the output dtype."""

    def kernel(x_ref, t_ref, w_ref, out_ref):
        x = x_ref[...].astype(jnp.float32)
        t = (t_ref[...] if stream_t else t_ref[0]).astype(jnp.float32)
        w = (w_ref[...] if stream_w else w_ref[0]).astype(jnp.float32)
        d = x - t
        out_ref[...] = (d * d * w).astype(out_ref.dtype)

    return kernel


# ---------------- wrapper ---------------------------------------------------------

def weighted_mse_loss(inp, target, weight, reduction="mean"):
    inp = jnp.asarray(inp)
    target = jnp.asarray(target)   # keep native dtype; upcast to f32 on the VPU
    weight = jnp.asarray(weight)
    out_dtype = jnp.result_type(inp.dtype, target.dtype, weight.dtype)
    n = int(inp.size)

    # How target / weight reach the kernel:
    #   full-shape -> streamed from HBM; scalar -> (1,) f32 operand resident in SMEM.
    stream_t = target.shape == inp.shape
    stream_w = weight.shape == inp.shape
    if not stream_t and target.size != 1:
        # TODO(synk): per-channel target via a small reused VMEM block (avoid HBM broadcast).
        target = jnp.broadcast_to(target, inp.shape)
        stream_t = True
    if not stream_w and weight.size != 1:
        # TODO(synk): per-channel weight via a small reused VMEM block (avoid HBM broadcast).
        weight = jnp.broadcast_to(weight, inp.shape)
        stream_w = True

    # Lane-dense (rows, 128) view.  Zero-copy whenever n % 128 == 0 (common case);
    # otherwise pad < 128 elements (still costs one extra HBM pass per padded operand).
    if n % _LANES == 0:
        rows = n // _LANES
        padded = False

        def to2d(a):
            return a.reshape(rows, _LANES)
    else:
        rows = pl.cdiv(n, _LANES)
        pad = rows * _LANES - n
        padded = True

        # TODO(synk): remove this pad copy via masked manual-DMA tail handling.
        def to2d(a):
            return jnp.pad(a.reshape(-1), (0, pad)).reshape(rows, _LANES)

    elementwise = reduction not in ("mean", "sum")

    bytes_per_row = _LANES * inp.dtype.itemsize
    if stream_t:
        bytes_per_row += _LANES * target.dtype.itemsize
    if stream_w:
        bytes_per_row += _LANES * weight.dtype.itemsize
    if elementwise:
        bytes_per_row += _LANES * jnp.dtype(out_dtype).itemsize

    tile_rows = _choose_tile_rows(rows, bytes_per_row)
    n_blocks = pl.cdiv(rows, tile_rows)
    need_mask = n != n_blocks * tile_rows * _LANES  # padded tail and/or partial block

    tiled = pl.BlockSpec((tile_rows, _LANES), lambda i: (i, 0))
    smem = pl.BlockSpec(memory_space=pltpu.MemorySpace.SMEM)

    operands = [to2d(inp)]
    in_specs = [tiled]
    bytes_accessed = n * inp.dtype.itemsize
    if stream_t:
        operands.append(to2d(target))
        in_specs.append(tiled)
        bytes_accessed += n * target.dtype.itemsize
    else:
        operands.append(jnp.asarray(target, jnp.float32).reshape(1))
        in_specs.append(smem)
    if stream_w:
        operands.append(to2d(weight))
        in_specs.append(tiled)
        bytes_accessed += n * weight.dtype.itemsize
    else:
        operands.append(jnp.asarray(weight, jnp.float32).reshape(1))
        in_specs.append(smem)

    compiler_params = pltpu.CompilerParams(dimension_semantics=("parallel",))
    # TODO(synk): on v7x, confirm both TensorCores are busy; if not, add a leading
    # CORE_PARALLEL grid axis (or pl.core_map) splitting n_blocks across the cores.

    if not elementwise:
        p_rows = _partial_rows(tile_rows)
        kernel = _make_sum_kernel(stream_t, stream_w, tile_rows, p_rows, need_mask, n)
        partial = pl.pallas_call(
            kernel,
            out_shape=jax.ShapeDtypeStruct((n_blocks * p_rows, _LANES), jnp.float32),
            grid=(n_blocks,),
            in_specs=in_specs,
            out_specs=pl.BlockSpec((p_rows, _LANES), lambda i: (i, 0)),
            compiler_params=compiler_params,
            cost_estimate=pl.CostEstimate(
                flops=3 * n, transcendentals=0,
                bytes_accessed=bytes_accessed + n_blocks * p_rows * _LANES * 4),
        )(*operands)
        total = jnp.sum(partial, dtype=jnp.float32)  # tiny array, tree-summed by XLA
        if reduction == "mean":
            total = total / n
        return total.astype(out_dtype)

    kernel = _make_elem_kernel(stream_t, stream_w)
    out2 = pl.pallas_call(
        kernel,
        out_shape=jax.ShapeDtypeStruct((rows, _LANES), out_dtype),
        grid=(n_blocks,),
        in_specs=in_specs,
        out_specs=tiled,
        compiler_params=compiler_params,
        cost_estimate=pl.CostEstimate(
            flops=3 * n, transcendentals=0,
            bytes_accessed=bytes_accessed + n * jnp.dtype(out_dtype).itemsize),
    )(*operands)
    if padded:
        # TODO(synk): avoid this trim copy with a masked final-block store.
        return out2.reshape(-1)[:n].reshape(inp.shape)
    return out2.reshape(inp.shape)  # free reshape (no pad, no trim)


class WeightedMSELoss:
    """Thin parity wrapper mirroring the PyTorch module."""

    def __init__(self, reduction="mean"):
        self.reduction = reduction

    def __call__(self, input, target, weight):
        return weighted_mse_loss(input, target, weight, self.reduction)


if __name__ == "__main__":
    key = jax.random.PRNGKey(0)
    k1, k2, k3, k4, k5, k6 = jax.random.split(key, 6)

    # NCHW-like aligned shape (n % 128 == 0 -> zero-copy fast path)
    shape = (2, 4, 16, 16)
    x = jax.random.normal(k1, shape, dtype=jnp.float32)
    t = jax.random.normal(k2, shape, dtype=jnp.float32)
    w = jax.random.uniform(k3, shape, dtype=jnp.float32)
    ref = (x - t) ** 2 * w

    out_mean = jax.block_until_ready(weighted_mse_loss(x, t, w, "mean"))
    out_sum = jax.block_until_ready(weighted_mse_loss(x, t, w, "sum"))
    out_none = jax.block_until_ready(weighted_mse_loss(x, t, w, "none"))
    assert jnp.allclose(out_mean, ref.mean(), rtol=1e-5, atol=1e-5)
    assert jnp.allclose(out_sum, ref.sum(), rtol=1e-5, atol=1e-3)
    assert out_none.shape == shape and jnp.allclose(out_none, ref, rtol=1e-5, atol=1e-6)

    # scalar weight -> SMEM path (no full-size broadcast stream in HBM)
    ws = jnp.float32(0.37)
    ref_s = (x - t) ** 2 * ws
    ms = jax.block_until_ready(weighted_mse_loss(x, t, ws, "mean"))
    es = jax.block_until_ready(weighted_mse_loss(x, t, ws, "none"))
    assert jnp.allclose(ms, ref_s.mean(), rtol=1e-5, atol=1e-5)
    assert es.shape == shape and jnp.allclose(es, ref_s, rtol=1e-5, atol=1e-6)

    # unaligned small shape -> pad / in-kernel mask fallback path
    shape2 = (3, 5, 7)
    x2 = jax.random.normal(k4, shape2, dtype=jnp.float32)
    t2 = jax.random.normal(k5, shape2, dtype=jnp.float32)
    w2 = jax.random.uniform(k6, shape2, dtype=jnp.float32)
    ref2 = (x2 - t2) ** 2 * w2
    m2 = jax.block_until_ready(weighted_mse_loss(x2, t2, w2, "mean"))
    n2 = jax.block_until_ready(weighted_mse_loss(x2, t2, w2, "none"))
    assert jnp.allclose(m2, ref2.mean(), rtol=1e-5, atol=1e-5)
    assert n2.shape == shape2 and jnp.allclose(n2, ref2, rtol=1e-5, atol=1e-6)

    # mixed dtypes: bf16 inputs with f32 weight, no wrapper-side casts
    xb = x.astype(jnp.bfloat16)
    tb = t.astype(jnp.bfloat16)
    refb = (xb.astype(jnp.float32) - tb.astype(jnp.float32)) ** 2 * w
    mb = jax.block_until_ready(weighted_mse_loss(xb, tb, w, "mean"))
    assert jnp.allclose(mb, refb.mean(), rtol=2e-2, atol=2e-2)

    print("KERNEL_OK")
</pallas_src>

<mosaic_0001>
module attributes {stable_mosaic.version = 11 : i64} {
  func.func @kernel(%arg0: i32, %arg1: memref<16x128xf32, #tpu.memory_space<vmem>>, %arg2: memref<16x128xf32, #tpu.memory_space<vmem>>, %arg3: memref<16x128xf32, #tpu.memory_space<vmem>>, %arg4: memref<16x128xf32, #tpu.memory_space<vmem>>) attributes {dimension_semantics = [#tpu.dimension_semantics<parallel>], iteration_bounds = array<i64: 1>, scalar_prefetch = 0 : i64, scratch_operands = 0 : i64, tpu.core_type = #tpu.core_type<tc>, window_params = [{transform_indices = @transform_0, window_bounds = array<i64: 16, 128>}, {transform_indices = @transform_1, window_bounds = array<i64: 16, 128>}, {transform_indices = @transform_2, window_bounds = array<i64: 16, 128>}, {transform_indices = @transform_3, window_bounds = array<i64: 16, 128>}]} {
    %c0 = arith.constant 0 : index
    %c0_0 = arith.constant 0 : index
    %0 = vector.load %arg1[%c0, %c0_0] : memref<16x128xf32, #tpu.memory_space<vmem>>, vector<16x128xf32>
    %c0_1 = arith.constant 0 : index
    %c0_2 = arith.constant 0 : index
    %1 = vector.load %arg2[%c0_1, %c0_2] : memref<16x128xf32, #tpu.memory_space<vmem>>, vector<16x128xf32>
    %c0_3 = arith.constant 0 : index
    %c0_4 = arith.constant 0 : index
    %2 = vector.load %arg3[%c0_3, %c0_4] : memref<16x128xf32, #tpu.memory_space<vmem>>, vector<16x128xf32>
    %3 = arith.subf %0, %1 : vector<16x128xf32>
    %4 = arith.mulf %3, %3 : vector<16x128xf32>
    %5 = arith.mulf %4, %2 : vector<16x128xf32>
    %6 = vector.shape_cast %5 : vector<16x128xf32> to vector<1x16x128xf32>
    %cst = arith.constant dense<0.000000e+00> : vector<16x128xf32>
    %7 = vector.multi_reduction <add>, %6, %cst [0] : vector<1x16x128xf32> to vector<16x128xf32>
    %c0_5 = arith.constant 0 : index
    %c0_6 = arith.constant 0 : index
    %8 = vector.load %arg4[%c0_5, %c0_6] : memref<16x128xf32, #tpu.memory_space<vmem>>, vector<16x128xf32>
    tpu.vector_store %arg4[%c0_5, %c0_6], %7 {strides = array<i32>} : memref<16x128xf32, #tpu.memory_space<vmem>>, vector<16x128xf32>,
    return
  }
  func.func @transform_0(%arg0: i32) -> (i32, i32) {
    %c0_i32 = arith.constant 0 : i32
    %c0_i32_0 = arith.constant 0 : i32
    return %arg0, %c0_i32 : i32, i32
  }
  func.func @transform_1(%arg0: i32) -> (i32, i32) {
    %c0_i32 = arith.constant 0 : i32
    %c0_i32_0 = arith.constant 0 : i32
    return %arg0, %c0_i32 : i32, i32
  }
  func.func @transform_2(%arg0: i32) -> (i32, i32) {
    %c0_i32 = arith.constant 0 : i32
    %c0_i32_0 = arith.constant 0 : i32
    return %arg0, %c0_i32 : i32, i32
  }
  func.func @transform_3(%arg0: i32) -> (i32, i32) {
    %c0_i32 = arith.constant 0 : i32
    %c0_i32_0 = arith.constant 0 : i32
    return %arg0, %c0_i32 : i32, i32
  }
}

</mosaic_0001>

<llo_original>
// kernel: tpu_custom_call.1
$region0: #{tpu_custom_call.1}
  #allocation0 [shape = 'u32[]', space=smem, size = 0x4, offset = 0x4, fixed_abs, tag = 'smem constant byte address 0x4 - core index']
  #allocation1 [shape = 'u32[144,128]{1,0:T(1,128)}', space=vmem, size = 0x12000, scoped, tag = 'internal scratch']
  %s0 = inlined_call_operand.hbm [shape: f32[16,128], index: 0, kind: input, shape index: {}]
  %s1 = inlined_call_operand.hbm [shape: f32[16,128], index: 1, kind: input, shape index: {}]
  %s2 = inlined_call_operand.hbm [shape: f32[16,128], index: 2, kind: input, shape index: {}]
  %s3 = inlined_call_operand.hbm [shape: f32[16,128], index: 3, kind: output, shape index: {}]
  %s4 = sld [smem:[#allocation0]]
  $region34: #{tpu_custom_call.1} parent=0
    _
  %s6 = ssub.s32 1, %s4
  %s7 = scalar_select 0, %s6, %s4
  $region1: #{tpu_custom_call.1} parent=0
    #allocation2 [shape = 'u8[8192]{0}', space=vmem, size = 0x2000, scoped, tag = 'input window, operand 0, single buffered']
    #allocation3 [shape = 's32[1]{0}', space=sflag, size = 0x4, scoped, tag = 'scoped memory for tpu_custom_call.1']
    #allocation4 [shape = 's32[1]{0}', space=sflag, size = 0x4, scoped, tag = 'scoped memory for tpu_custom_call.1']
    #allocation5 [shape = 'u8[8192]{0}', space=vmem, size = 0x2000, scoped, tag = 'input window, operand 1, single buffered']
    #allocation6 [shape = 's32[1]{0}', space=sflag, size = 0x4, scoped, tag = 'scoped memory for tpu_custom_call.1']
    #allocation7 [shape = 'u8[8192]{0}', space=vmem, size = 0x2000, scoped, tag = 'input window, operand 2, single buffered']
    #allocation8 [shape = 'u8[8192]{0}', space=vmem, size = 0x2000, scoped, tag = 'output window, operand 0, single buffered']
    %8 = vsyncpa [#allocation3], 0
    %9 = vsyncpa [#allocation6], 0
    %10 = vsyncpa [#allocation4], 0
    // Predicated region
    $region2: #{tpu_custom_call.1} parent=1 // pred_check
      _
    $region3: #{tpu_custom_call.1} parent=1 // pred_check_branch
      %12 = sbr.rel (0) target = $region5
    $region4: #{tpu_custom_call.1} parent=1 // pred_region
      %s14 = ssub.s32 256, 256
      %15 = vsyncadd [#allocation3], %s14
      %s16 = sshll.u32 [#allocation2], 4
      %s17 = int_to_ptr.vmem [resolvable:$true] %s16
      %22 = dma.hbm_to_vmem [thread:$0]  %s0, 256, %s17, [#allocation3], 128, 128, 8
    $region5: #{tpu_custom_call.1} parent=1 // pred_fallthru
      _
    // Predicated region
    $region6: #{tpu_custom_call.1} parent=1 // pred_check
      _
    $region7: #{tpu_custom_call.1} parent=1 // pred_check_branch
      %24 = sbr.rel (0) target = $region9
    $region8: #{tpu_custom_call.1} parent=1 // pred_region
      %s26 = ssub.s32 256, 256
      %27 = vsyncadd [#allocation6], %s26
      %s28 = sshll.u32 [#allocation5], 4
      %s29 = int_to_ptr.vmem [resolvable:$true] %s28
      %34 = dma.hbm_to_vmem [thread:$0]  %s1, 256, %s29, [#allocation6], 128, 128, 8
    $region9: #{tpu_custom_call.1} parent=1 // pred_fallthru
      _
    // Predicated region
    $region10: #{tpu_custom_call.1} parent=1 // pred_check
      _
    $region11: #{tpu_custom_call.1} parent=1 // pred_check_branch
      %36 = sbr.rel (0) target = $region13
    $region12: #{tpu_custom_call.1} parent=1 // pred_region
      %s38 = ssub.s32 256, 256
      %39 = vsyncadd [#allocation6], %s38
      %s40 = sshll.u32 [#allocation7], 4
      %s41 = int_to_ptr.vmem [resolvable:$true] %s40
      %46 = dma.hbm_to_vmem [thread:$0]  %s2, 256, %s41, [#allocation6], 128, 128, 8
    $region13: #{tpu_custom_call.1} parent=1 // pred_fallthru
      _
    // Predicated region
    $region14: #{tpu_custom_call.1} parent=1 // pred_check
      _
    $region15: #{tpu_custom_call.1} parent=1 // pred_check_branch
      %48 = sbr.rel (0) target = $region17
    $region16: #{tpu_custom_call.1} parent=1 // pred_region
      %49 = dma.done [#allocation3], 256
    $region17: #{tpu_custom_call.1} parent=1 // pred_fallthru
      _
    // Predicated region
    $region18: #{tpu_custom_call.1} parent=1 // pred_check
      _
    $region19: #{tpu_custom_call.1} parent=1 // pred_check_branch
      %51 = sbr.rel (0) target = $region21
    $region20: #{tpu_custom_call.1} parent=1 // pred_region
      %52 = dma.done [#allocation6], 256
    $region21: #{tpu_custom_call.1} parent=1 // pred_fallthru
      _
    // Predicated region
    $region22: #{tpu_custom_call.1} parent=1 // pred_check
      _
    $region23: #{tpu_custom_call.1} parent=1 // pred_check_branch
      %54 = sbr.rel (0) target = $region25
    $region24: #{tpu_custom_call.1} parent=1 // pred_region
      %55 = dma.done [#allocation6], 256
    $region25: #{tpu_custom_call.1} parent=1 // pred_fallthru
      _
    %v56 = vld [vmem:[#allocation2] sm:$0xff]
    %v57 = vld [vmem:[#allocation2 + $0x8] sm:$0xff]
    %v58 = vld [vmem:[#allocation5] sm:$0xff]
    %v59 = vld [vmem:[#allocation5 + $0x8] sm:$0xff]
    %v60 = vld [vmem:[#allocation7] sm:$0xff]
    %v61 = vld [vmem:[#allocation7 + $0x8] sm:$0xff]
    %v62 = vsub.f32 %v56, %v58
    %v63 = vsub.f32 %v57, %v59
    %v64 = vmul.f32 %v62, %v62
    %v65 = vmul.f32 %v63, %v63
    %v66 = vmul.f32 %v64, %v60
    %v67 = vmul.f32 %v65, %v61
    %v68 = vadd.f32 %v66, 0.0
    %v69 = vadd.f32 %v67, 0.0
    %70 = vst [vmem:[#allocation8] sm:$0xff] %v68
    %71 = vst [vmem:[#allocation8 + $0x8] sm:$0xff] %v69
    // Predicated region
    $region26: #{tpu_custom_call.1} parent=1 // pred_check
      _
    $region27: #{tpu_custom_call.1} parent=1 // pred_check_branch
      %73 = sbr.rel (0) target = $region29
    $region28: #{tpu_custom_call.1} parent=1 // pred_region
      %s75 = ssub.s32 256, 256
      %76 = vsyncadd [#allocation4], %s75
      %s77 = sshll.u32 [#allocation8], 4
      %s78 = int_to_ptr.vmem [resolvable:$true] %s77
      %83 = dma.vmem_to_hbm [thread:$0]  %s78, 256, %s3, [#allocation4], 128, 128, 8
    $region29: #{tpu_custom_call.1} parent=1 // pred_fallthru
      _
    // Predicated region
    $region30: #{tpu_custom_call.1} parent=1 // pred_check
      _
    $region31: #{tpu_custom_call.1} parent=1 // pred_check_branch
      %85 = sbr.rel (0) target = $region33
    $region32: #{tpu_custom_call.1} parent=1 // pred_region
      %86 = dma.done [#allocation4], 256
    $region33: #{tpu_custom_call.1} parent=1 // pred_fallthru
      _
    %87 = vsyncpa [#allocation3], 1
    %88 = vsyncpa [#allocation6], 1
    %89 = vsyncpa [#allocation4], 1

</llo_original>
